<compile_context>
chip_gen: v6e
topology: v6e:2x2x1
jax: 0.10.0
libtpu: 0.0.40
codegen_flags: <defaults>
</compile_context>

<pallas_src>
import functools

import jax
import jax.numpy as jnp
from jax.experimental import pallas as pl
from jax.experimental.pallas import tpu as pltpu

_LANES = 128
_SUBLANES = 8


def _round_up(x, m):
    return ((x + m - 1) // m) * m


def _static_pow(x, gamma):
    """x ** gamma with gamma static; small integer gammas unroll to multiplies (no EUP pow)."""
    g = float(gamma)
    if g == 0.0:
        return jnp.ones_like(x)
    if g.is_integer() and 1.0 <= g <= 8.0:
        out = x
        for _ in range(int(g) - 1):
            out = out * x
        return out
    return x ** g  # non-integer gamma: genuine pow (transcendental)


def _precision_focused_loss_kernel(o_ref, t_ref, w_ref, acc_ref, *,
                                   gamma, fp_weight, fn_weight, hard_targets):
    # acc_ref is this split's (8, 128) f32 partial-sum block; it stays resident
    # across the "arbitrary" tile axis (output index_map ignores that axis).
    @pl.when(pl.program_id(1) == 0)
    def _init():
        acc_ref[...] = jnp.zeros_like(acc_ref)

    o = o_ref[...].astype(jnp.float32)          # [TB, 128] probabilities in (0, 1)
    t = t_ref[...].astype(jnp.float32)          # [TB, 128] targets
    w = w_ref[...].astype(jnp.float32)          # [1,128] or [TB,128]; alpha pre-folded

    if hard_targets:
        # Exact for targets in {0, 1}:  bce = -clamp(log p_correct, -100).
        # (exp(-bce) differs from pt only below f32 resolution: exp(-100) ~ 4e-44.)
        pt = jnp.where(t > 0.5, o, 1.0 - o)
        bce = -jnp.maximum(jnp.log(pt), -100.0)                 # 1 transcendental/element
    else:
        # General / soft-label path: exactly PyTorch's formula (2 logs + 1 exp).
        log_o = jnp.maximum(jnp.log(o), -100.0)
        log_1mo = jnp.maximum(jnp.log(1.0 - o), -100.0)
        bce = -(t * log_o + (1.0 - t) * log_1mo)
        pt = jnp.exp(-bce)

    focal = _static_pow(1.0 - pt, gamma)                        # alpha folded into w
    asym = 1.0 + jnp.where(o > 0.5,
                           (1.0 - t) * (fp_weight - 1.0),       # false-positive branch
                           t * (fn_weight - 1.0))               # false-negative branch
    weighted = bce * w * focal * asym                           # [TB, 128]

    # Elementwise vreg accumulation only; the single cross-lane sum is in the wrapper.
    acc_ref[...] += jnp.sum(weighted.reshape(-1, _SUBLANES, _LANES), axis=0)


def precision_focused_loss(outputs, targets, class_weights,
                           alpha=1.0, gamma=2.0, fp_weight=4.0, fn_weight=1.0,
                           *, hard_targets=True, block_rows=1024, num_splits=2):
    """outputs/targets: [B, C] probabilities / labels (f32 or bf16).
    class_weights: dict {label: weight} (module-style) or a 1-D array of length C."""
    if isinstance(class_weights, dict):
        w = jnp.asarray([float(class_weights[k]) for k in class_weights.keys()],
                        dtype=jnp.float32)
    else:
        w = jnp.asarray(class_weights, dtype=jnp.float32)

    B, C = outputs.shape
    n_elems = B * C

    # ---- lane-dense layout: flatten [B, C] -> padded [rows_padded, 128] ----------
    rows = _round_up(max(pl.cdiv(n_elems, _LANES), 1), _SUBLANES)
    rows_per_split = _round_up(pl.cdiv(rows, num_splits), _SUBLANES)
    tb = min(_round_up(block_rows, _SUBLANES), rows_per_split)
    tiles_per_split = pl.cdiv(rows_per_split, tb)
    rows_padded = num_splits * tiles_per_split * tb
    pad = rows_padded * _LANES - n_elems

    # Pad with (o=1, t=1): bce == 0 -> zero contribution in both kernel paths.
    o_2d = jnp.pad(outputs.reshape(-1), (0, pad),
                   constant_values=1.0).reshape(rows_padded, _LANES)
    t_2d = jnp.pad(targets.reshape(-1), (0, pad),
                   constant_values=1.0).reshape(rows_padded, _LANES)

    w_alpha = w * jnp.float32(alpha)            # fold alpha into the class weights
    if _LANES % C == 0:
        # Every 128-lane row holds whole samples -> a single [1, 128] weight row,
        # loaded once and broadcast over the batch rows inside the kernel.
        w_arr = jnp.tile(w_alpha, _LANES // C).reshape(1, _LANES)
        w_spec = pl.BlockSpec((1, _LANES), lambda p, i: (0, 0))
    else:
        # General C: stream a full per-element weight plane alongside the data.
        w_arr = jnp.pad(jnp.tile(w_alpha, B), (0, pad),
                        constant_values=0.0).reshape(rows_padded, _LANES)
        w_spec = pl.BlockSpec((tb, _LANES),
                              lambda p, i: (p * tiles_per_split + i, 0))

    data_spec = pl.BlockSpec((tb, _LANES),
                             lambda p, i: (p * tiles_per_split + i, 0))
    # Lane-dense partial-sum output; revisited across the "arbitrary" tile axis.
    out_spec = pl.BlockSpec((_SUBLANES, _LANES), lambda p, i: (p, 0))

    kernel = functools.partial(
        _precision_focused_loss_kernel,
        gamma=float(gamma), fp_weight=float(fp_weight),
        fn_weight=float(fn_weight), hard_targets=bool(hard_targets))

    partial_sums = pl.pallas_call(
        kernel,
        out_shape=jax.ShapeDtypeStruct((num_splits * _SUBLANES, _LANES), jnp.float32),
        grid_spec=pltpu.PrefetchScalarGridSpec(
            num_scalar_prefetch=0,
            grid=(num_splits, tiles_per_split),
            in_specs=[data_spec, data_spec, w_spec],
            out_specs=out_spec,
        ),
        compiler_params=pltpu.CompilerParams(
            dimension_semantics=("parallel", "arbitrary")),
    )(o_2d, t_2d, w_arr)

    # Single cross-lane reduction + mean scaling (1/N) done once, outside the kernel.
    return jnp.sum(partial_sums) / jnp.float32(n_elems)


def _reference(outputs, targets, weights, alpha=1.0, gamma=2.0,
               fp_weight=4.0, fn_weight=1.0):
    o = outputs.astype(jnp.float32)
    t = targets.astype(jnp.float32)
    bce = -(t * jnp.maximum(jnp.log(o), -100.0)
            + (1.0 - t) * jnp.maximum(jnp.log(1.0 - o), -100.0))
    fps = (o > 0.5).astype(jnp.float32) * (1.0 - t)
    fns = (o <= 0.5).astype(jnp.float32) * t
    pt = jnp.exp(-bce)
    focal = alpha * (1.0 - pt) ** gamma
    asym = 1.0 + fps * (fp_weight - 1.0) + fns * (fn_weight - 1.0)
    return jnp.mean(bce * weights[None, :] * focal * asym)


if __name__ == "__main__":
    # Small shapes consistent with the module: multi-label head with 4 classes.
    B, C = 8, 4
    key = jax.random.PRNGKey(0)
    k1, k2 = jax.random.split(key)

    logits = jax.random.normal(k1, (B, C), dtype=jnp.float32)
    outputs = jax.nn.sigmoid(logits)                                 # probabilities
    targets = (jax.random.uniform(k2, (B, C)) > 0.5).astype(jnp.float32)

    # class_weights dict, mirroring the PyTorch module's interface
    class_weights = {"label_0": 1.0, "label_1": 2.0, "label_2": 0.5, "label_3": 1.5}
    w_vec = jnp.array(list(class_weights.values()), dtype=jnp.float32)

    loss = precision_focused_loss(outputs, targets, class_weights,
                                  alpha=1.0, gamma=2.0,
                                  fp_weight=4.0, fn_weight=1.0)
    loss = jax.block_until_ready(loss)

    ref = _reference(outputs, targets, w_vec)
    assert jnp.allclose(loss, ref, rtol=1e-5, atol=1e-6), (loss, ref)

    # Also exercise the general (soft-label capable) path.
    loss_soft = precision_focused_loss(outputs, targets, class_weights,
                                       hard_targets=False)
    loss_soft = jax.block_until_ready(loss_soft)
    assert jnp.allclose(loss_soft, ref, rtol=1e-5, atol=1e-6), (loss_soft, ref)

    print("KERNEL_OK")
</pallas_src>

<mosaic_0001>
module attributes {stable_mosaic.version = 11 : i64} {
  func.func @_precision_focused_loss_kernel(%arg0: i32, %arg1: i32, %arg2: memref<8x128xf32, #tpu.memory_space<vmem>>, %arg3: memref<8x128xf32, #tpu.memory_space<vmem>>, %arg4: memref<1x128xf32, #tpu.memory_space<vmem>>, %arg5: memref<8x128xf32, #tpu.memory_space<vmem>>) attributes {dimension_semantics = [#tpu.dimension_semantics<parallel>, #tpu.dimension_semantics<arbitrary>], iteration_bounds = array<i64: 2, 1>, scalar_prefetch = 0 : i64, scratch_operands = 0 : i64, tpu.core_type = #tpu.core_type<tc>, window_params = [{transform_indices = @transform_0, window_bounds = array<i64: 8, 128>}, {transform_indices = @transform_1, window_bounds = array<i64: 8, 128>}, {pipeline_mode = #tpu.pipeline_mode<synchronous>, transform_indices = @transform_2, window_bounds = array<i64: 1, 128>}, {transform_indices = @transform_3, window_bounds = array<i64: 8, 128>}]} {
    %c0_i32 = arith.constant 0 : i32
    %0 = arith.cmpi eq, %arg1, %c0_i32 : i32
    %1 = arith.extui %0 : i1 to i32
    %c0_i32_0 = arith.constant 0 : i32
    %2 = arith.cmpi ne, %1, %c0_i32_0 : i32
    scf.if %2 {
      %cst_20 = arith.constant 0.000000e+00 : f32
      %39 = vector.broadcast %cst_20 : f32 to vector<8x128xf32>
      %c0_21 = arith.constant 0 : index
      %c0_22 = arith.constant 0 : index
      %40 = vector.load %arg5[%c0_21, %c0_22] : memref<8x128xf32, #tpu.memory_space<vmem>>, vector<8x128xf32>
      tpu.vector_store %arg5[%c0_21, %c0_22], %39 {strides = array<i32>} : memref<8x128xf32, #tpu.memory_space<vmem>>, vector<8x128xf32>,
    } else {
    }
    %c0 = arith.constant 0 : index
    %c0_1 = arith.constant 0 : index
    %3 = vector.load %arg2[%c0, %c0_1] : memref<8x128xf32, #tpu.memory_space<vmem>>, vector<8x128xf32>
    %c0_2 = arith.constant 0 : index
    %c0_3 = arith.constant 0 : index
    %4 = vector.load %arg3[%c0_2, %c0_3] : memref<8x128xf32, #tpu.memory_space<vmem>>, vector<8x128xf32>
    %c0_4 = arith.constant 0 : index
    %c0_5 = arith.constant 0 : index
    %5 = vector.load %arg4[%c0_4, %c0_5] : memref<1x128xf32, #tpu.memory_space<vmem>>, vector<1x128xf32>
    %cst = arith.constant 5.000000e-01 : f32
    %6 = vector.broadcast %cst : f32 to vector<8x128xf32>
    %7 = arith.cmpf ogt, %4, %6 : vector<8x128xf32>
    %cst_6 = arith.constant 1.000000e+00 : f32
    %8 = vector.broadcast %cst_6 : f32 to vector<8x128xf32>
    %9 = arith.subf %8, %3 : vector<8x128xf32>
    %10 = arith.select %7, %3, %9 : vector<8x128xi1>, vector<8x128xf32>
    %11 = math.log %10 : vector<8x128xf32>
    %cst_7 = arith.constant -1.000000e+02 : f32
    %12 = vector.broadcast %cst_7 : f32 to vector<8x128xf32>
    %13 = arith.maximumf %11, %12 : vector<8x128xf32>
    %cst_8 = arith.constant 0.000000e+00 : f32
    %14 = vector.broadcast %cst_8 : f32 to vector<8x128xf32>
    %15 = arith.subf %14, %13 : vector<8x128xf32>
    %cst_9 = arith.constant 1.000000e+00 : f32
    %16 = vector.broadcast %cst_9 : f32 to vector<8x128xf32>
    %17 = arith.subf %16, %10 : vector<8x128xf32>
    %18 = arith.mulf %17, %17 : vector<8x128xf32>
    %cst_10 = arith.constant 5.000000e-01 : f32
    %19 = vector.broadcast %cst_10 : f32 to vector<8x128xf32>
    %20 = arith.cmpf ogt, %3, %19 : vector<8x128xf32>
    %cst_11 = arith.constant 1.000000e+00 : f32
    %21 = vector.broadcast %cst_11 : f32 to vector<8x128xf32>
    %22 = arith.subf %21, %4 : vector<8x128xf32>
    %cst_12 = arith.constant 3.000000e+00 : f32
    %23 = vector.broadcast %cst_12 : f32 to vector<8x128xf32>
    %24 = arith.mulf %22, %23 : vector<8x128xf32>
    %cst_13 = arith.constant 0.000000e+00 : f32
    %25 = vector.broadcast %cst_13 : f32 to vector<8x128xf32>
    %26 = arith.mulf %4, %25 : vector<8x128xf32>
    %27 = arith.select %20, %24, %26 : vector<8x128xi1>, vector<8x128xf32>
    %cst_14 = arith.constant 1.000000e+00 : f32
    %28 = vector.broadcast %cst_14 : f32 to vector<8x128xf32>
    %29 = arith.addf %28, %27 : vector<8x128xf32>
    %30 = vector.broadcast %5 : vector<1x128xf32> to vector<8x128xf32>
    %31 = arith.mulf %15, %30 : vector<8x128xf32>
    %32 = arith.mulf %31, %18 : vector<8x128xf32>
    %33 = arith.mulf %32, %29 : vector<8x128xf32>
    %c0_15 = arith.constant 0 : index
    %c0_16 = arith.constant 0 : index
    %34 = vector.load %arg5[%c0_15, %c0_16] : memref<8x128xf32, #tpu.memory_space<vmem>>, vector<8x128xf32>
    %35 = vector.shape_cast %33 : vector<8x128xf32> to vector<1x8x128xf32>
    %cst_17 = arith.constant dense<0.000000e+00> : vector<8x128xf32>
    %36 = vector.multi_reduction <add>, %35, %cst_17 [0] : vector<1x8x128xf32> to vector<8x128xf32>
    %37 = arith.addf %34, %36 : vector<8x128xf32>
    %c0_18 = arith.constant 0 : index
    %c0_19 = arith.constant 0 : index
    %38 = vector.load %arg5[%c0_18, %c0_19] : memref<8x128xf32, #tpu.memory_space<vmem>>, vector<8x128xf32>
    tpu.vector_store %arg5[%c0_18, %c0_19], %37 {strides = array<i32>} : memref<8x128xf32, #tpu.memory_space<vmem>>, vector<8x128xf32>,
    return
  }
  func.func @transform_0(%arg0: i32, %arg1: i32) -> (i32, i32) {
    %c1_i32 = arith.constant 1 : i32
    %0 = arith.muli %arg0, %c1_i32 : i32
    %1 = arith.addi %0, %arg1 : i32
    %c0_i32 = arith.constant 0 : i32
    %c0_i32_0 = arith.constant 0 : i32
    return %1, %c0_i32 : i32, i32
  }
  func.func @transform_1(%arg0: i32, %arg1: i32) -> (i32, i32) {
    %c1_i32 = arith.constant 1 : i32
    %0 = arith.muli %arg0, %c1_i32 : i32
    %1 = arith.addi %0, %arg1 : i32
    %c0_i32 = arith.constant 0 : i32
    %c0_i32_0 = arith.constant 0 : i32
    return %1, %c0_i32 : i32, i32
  }
  func.func @transform_2(%arg0: i32, %arg1: i32) -> (i32, i32) {
    %c0_i32 = arith.constant 0 : i32
    %c0_i32_0 = arith.constant 0 : i32
    %c0_i32_1 = arith.constant 0 : i32
    return %c0_i32, %c0_i32_0 : i32, i32
  }
  func.func @transform_3(%arg0: i32, %arg1: i32) -> (i32, i32) {
    %c0_i32 = arith.constant 0 : i32
    %c0_i32_0 = arith.constant 0 : i32
    return %arg0, %c0_i32 : i32, i32
  }
}

</mosaic_0001>

<llo_original>
// kernel: tpu_custom_call.1
$region0: #{tpu_custom_call.1}
  #allocation0 [shape = 'u32[]', space=smem, size = 0x4, offset = 0x4, fixed_abs, tag = 'smem constant byte address 0x4 - core index']
  #allocation1 [shape = 'u32[144,128]{1,0:T(1,128)}', space=vmem, size = 0x12000, scoped, tag = 'internal scratch']
  %s0 = inlined_call_operand.hbm [shape: f32[16,128], index: 0, kind: input, shape index: {}]
  %s1 = inlined_call_operand.hbm [shape: f32[16,128], index: 1, kind: input, shape index: {}]
  %s2 = inlined_call_operand.vmem [shape: f32[1,128], index: 2, kind: input, shape index: {}]
  %s3 = inlined_call_operand.hbm [shape: f32[16,128], index: 3, kind: output, shape index: {}]
  %s4 = sld [smem:[#allocation0]]
  $region57: #{tpu_custom_call.1} parent=0
    _
  %s6 = ssub.s32 1, %s4
  %s7 = scalar_select 0, %s6, %s4
  $region1: #{tpu_custom_call.1} parent=0
    #allocation2 [shape = 'u8[8192]{0}', space=vmem, size = 0x2000, scoped, tag = 'input window, operand 0']
    #allocation3 [shape = 's32[2]{0}', space=sflag, size = 0x8, scoped, tag = 'scoped memory for tpu_custom_call.1']
    #allocation4 [shape = 's32[2]{0}', space=sflag, size = 0x8, scoped, tag = 'scoped memory for tpu_custom_call.1']
    #allocation5 [shape = 'u8[8192]{0}', space=vmem, size = 0x2000, scoped, tag = 'input window, operand 1']
    #allocation6 [shape = 's32[2]{0}', space=sflag, size = 0x8, scoped, tag = 'scoped memory for tpu_custom_call.1']
    #allocation7 [shape = 'u8[8192]{0}', space=vmem, size = 0x2000, scoped, tag = 'output window, operand 0']
    %8 = vsyncpa [#allocation3], 0
    %s9 = scalar_lea.sflag [#allocation3], 1
    %10 = vsyncpa %s9, 0
    %11 = vsyncpa [#allocation6], 0
    %s12 = scalar_lea.sflag [#allocation6], 1
    %13 = vsyncpa %s12, 0
    %14 = vsyncpa [#allocation4], 0
    %s15 = scalar_lea.sflag [#allocation4], 1
    %16 = vsyncpa %s15, 0
    loop: start=0, step=1, limit=4
    $region2: #{tpu_custom_call.1} parent=1 // loop_pre_header
      _
    $region3: #{tpu_custom_call.1} parent=1 // loop_header
      %s18 = sphi 0, %s22
      %p19 = scmp.ge.s32.totalorder %s18, 4
      %s25 = sphi 0, %s37
      %s26 = sphi 0, %s33
      %s27 = sphi 0, %s25
      %s28 = sphi 0, %s26
      %s29 = sphi 0, %s27
      %s30 = sphi 0, %s28
      %s42 = sphi 0, %s44
      %s45 = sphi 0, %s42
      %s46 = sphi 0, %s45
      %s62 = sphi 0, %s46
      %s70 = sphi 0, %s72
      %s73 = sphi 0, %s70
      %s74 = sphi 0, %s73
      %s90 = sphi 0, %s74
      %s94 = sphi 0, %s94
      %s96 = sphi 0, %s94
      %s97 = sphi 0, %s96
      %s111 = sphi 0, %s97
      %s117 = sphi 0, %s119
      %s120 = sphi 0, %s117
      %s121 = sphi 0, %s120
      %s137 = sphi 0, %s121
    $region4: #{tpu_custom_call.1} parent=1 // loop_header_branch
      %21 = sbr.rel (%p19) target = $region8
    $region5: #{tpu_custom_call.1} parent=1 // loop_body
      %s23 = ssub.s32 %s18, 1
      %s24 = ssub.s32 %s18, 2
      %s31 = sadd.s32 1, %s26
      %p32 = scmp.ge.s32.totalorder %s31, 1
      %s33 = scalar_select %p32, 0, %s31
      %s34 = sadd.s32 1, %s25
      %s35 = scalar_select %p32, %s34, %s25
      %p36 = scmp.ge.s32.totalorder %s35, 2
      %s37 = scalar_select %p36, 0, %s35
      %s38 = sadd.s32 %s25, %s26
      %s39 = sadd.s32 %s37, %s33
      %s40 = ssub.s32 %s38, %s39
      %p41 = scmp.eq.s32.totalorder %s40, 0
      %s43 = sadd.s32 %s42, 1
      %s44 = scalar_select %p41, %s42, %s43
      %p47 = pneg %p41
      %p48 = scmp.eq.s32.totalorder %s18, 1
      %p49 = por %p47, %p48
      %p50 = scmp.ne.s32.totalorder %s42, %s45
      %p51 = scmp.eq.s32.totalorder %s18, 0
      %p52 = por %p50, %p51
      %p53 = scmp.ne.s32.totalorder %s42, %s45
      %p54 = scmp.eq.s32.totalorder %s23, 1
      %p55 = por %p53, %p54
      %p56 = scmp.ne.s32.totalorder %s45, %s46
      %p57 = scmp.eq.s32.totalorder %s23, 0
      %p58 = por %p56, %p57
      %p59 = scmp.ne.s32.totalorder %s45, %s46
      %p60 = scmp.eq.s32.totalorder %s24, 1
      %p61 = por %p59, %p60
      %p63 = scmp.ne.s32.totalorder %s46, %s62
      %p64 = scmp.eq.s32.totalorder %s24, 0
      %p65 = por %p63, %p64
      %s66 = sadd.s32 %s25, %s26
      %s67 = sadd.s32 %s37, %s33
      %s68 = ssub.s32 %s66, %s67
      %p69 = scmp.eq.s32.totalorder %s68, 0
      %s71 = sadd.s32 %s70, 1
      %s72 = scalar_select %p69, %s70, %s71
      %p75 = pneg %p69
      %p76 = scmp.eq.s32.totalorder %s18, 1
      %p77 = por %p75, %p76
      %p78 = scmp.ne.s32.totalorder %s70, %s73
      %p79 = scmp.eq.s32.totalorder %s18, 0
      %p80 = por %p78, %p79
      %p81 = scmp.ne.s32.totalorder %s70, %s73
      %p82 = scmp.eq.s32.totalorder %s23, 1
      %p83 = por %p81, %p82
      %p84 = scmp.ne.s32.totalorder %s73, %s74
      %p85 = scmp.eq.s32.totalorder %s23, 0
      %p86 = por %p84, %p85
      %p87 = scmp.ne.s32.totalorder %s73, %s74
      %p88 = scmp.eq.s32.totalorder %s24, 1
      %p89 = por %p87, %p88
      %p91 = scmp.ne.s32.totalorder %s74, %s90
      %p92 = scmp.eq.s32.totalorder %s24, 0
      %p93 = por %p91, %p92
      %s95 = sadd.s32 %s94, 1
      %p98 = scmp.eq.s32.totalorder %s18, 1
      %p99 = scmp.ne.s32.totalorder %s94, %s96
      %p100 = scmp.eq.s32.totalorder %s18, 0
      %p101 = por %p99, %p100
      %p102 = scmp.ne.s32.totalorder %s94, %s96
      %p103 = scmp.eq.s32.totalorder %s23, 1
      %p104 = por %p102, %p103
      %p105 = scmp.ne.s32.totalorder %s96, %s97
      %p106 = scmp.eq.s32.totalorder %s23, 0
      %p107 = por %p105, %p106
      %p108 = scmp.ne.s32.totalorder %s96, %s97
      %p109 = scmp.eq.s32.totalorder %s24, 1
      %p110 = por %p108, %p109
      %p112 = scmp.ne.s32.totalorder %s97, %s111
      %p113 = scmp.eq.s32.totalorder %s24, 0
      %p114 = por %p112, %p113
      %s115 = ssub.s32 %s25, %s37
      %p116 = scmp.eq.s32.totalorder %s115, 0
      %s118 = sadd.s32 %s117, 1
      %s119 = scalar_select %p116, %s117, %s118
      %p122 = pneg %p116
      %p123 = scmp.eq.s32.totalorder %s18, 1
      %p124 = por %p122, %p123
      %p125 = scmp.ne.s32.totalorder %s117, %s120
      %p126 = scmp.eq.s32.totalorder %s18, 0
      %p127 = por %p125, %p126
      %p128 = scmp.ne.s32.totalorder %s117, %s120
      %p129 = scmp.eq.s32.totalorder %s23, 1
      %p130 = por %p128, %p129
      %p131 = scmp.ne.s32.totalorder %s120, %s121
      %p132 = scmp.eq.s32.totalorder %s23, 0
      %p133 = por %p131, %p132
      %p134 = scmp.ne.s32.totalorder %s120, %s121
      %p135 = scmp.eq.s32.totalorder %s24, 1
      %p136 = por %p134, %p135
      %p138 = scmp.ne.s32.totalorder %s121, %s137
      %p139 = scmp.eq.s32.totalorder %s24, 0
      %p140 = por %p138, %p139
      %p141 = scmp.le.s32.totalorder 1, %s18
      %p142 = scmp.lt.s32.totalorder %s18, 3
      %p143 = pnand %p141, %p142
      %p144 = pneg %p143
      // Predicated region
      $region9: #{tpu_custom_call.1} parent=5 // pred_check
        _
      $region10: #{tpu_custom_call.1} parent=5 // pred_check_branch
        %146 = sbr.rel (%p143) target = $region12
      $region11: #{tpu_custom_call.1} parent=5 // pred_region
        %s147 = ssub.s32 %s18, 1
        // Predicated region
        $region13: #{tpu_custom_call.1} parent=11 // pred_check
          %p148 = pneg %p107
        $region14: #{tpu_custom_call.1} parent=11 // pred_check_branch
          %150 = sbr.rel (%p148) target = $region16
        $region15: #{tpu_custom_call.1} parent=11 // pred_region
          _
        $region16: #{tpu_custom_call.1} parent=11 // pred_fallthru
          _
      $region12: #{tpu_custom_call.1} parent=5 // pred_fallthru
        _
      %p151 = scmp.lt.s32.totalorder %s18, 2
      // Predicated region
      $region17: #{tpu_custom_call.1} parent=5 // pred_check
        %p152 = pneg %p151
      $region18: #{tpu_custom_call.1} parent=5 // pred_check_branch
        %154 = sbr.rel (%p152) target = $region20
      $region19: #{tpu_custom_call.1} parent=5 // pred_region
        // Predicated region
        $region21: #{tpu_custom_call.1} parent=19 // pred_check
          %p155 = pneg %p52
        $region22: #{tpu_custom_call.1} parent=19 // pred_check_branch
          %157 = sbr.rel (%p155) target = $region24
        $region23: #{tpu_custom_call.1} parent=19 // pred_region
          %s158 = sand.u32 %s42, 1
          %s159 = scalar_lea.sflag [#allocation3], %s158
          %s160 = sand.u32 %s42, 1
          %s161 = smul.addr %s160, 8
          %s162 = scalar_lea.vmem [#allocation2], %s161
          %s163 = sadd.s32 %s25, %s26
          %s165 = ssub.s32 128, 128
          %166 = vsyncadd %s159, %s165
          %s167 = smul.addr %s163, 128
          %s168 = scalar_lea.hbm %s0, %s167
          %s170 = sshll.u32 %s162, 4
          %s171 = int_to_ptr.vmem [resolvable:$true] %s170
          %173 = dma.hbm_to_vmem [thread:$0]  %s168, 128, %s171, %s159
        $region24: #{tpu_custom_call.1} parent=19 // pred_fallthru
          _
        // Predicated region
        $region25: #{tpu_custom_call.1} parent=19 // pred_check
          %p174 = pneg %p80
        $region26: #{tpu_custom_call.1} parent=19 // pred_check_branch
          %176 = sbr.rel (%p174) target = $region28
        $region27: #{tpu_custom_call.1} parent=19 // pred_region
          %s177 = sand.u32 %s70, 1
          %s178 = scalar_lea.sflag [#allocation6], %s177
          %s179 = sand.u32 %s70, 1
          %s180 = smul.addr %s179, 8
          %s181 = scalar_lea.vmem [#allocation5], %s180
          %s182 = sadd.s32 %s25, %s26
          %s184 = ssub.s32 128, 128
          %185 = vsyncadd %s178, %s184
          %s186 = smul.addr %s182, 128
          %s187 = scalar_lea.hbm %s1, %s186
          %s189 = sshll.u32 %s181, 4
          %s190 = int_to_ptr.vmem [resolvable:$true] %s189
          %192 = dma.hbm_to_vmem [thread:$0]  %s187, 128, %s190, %s178
        $region28: #{tpu_custom_call.1} parent=19 // pred_fallthru
          _
      $region20: #{tpu_custom_call.1} parent=5 // pred_fallthru
        _
      %p193 = scmp.le.s32.totalorder 1, %s18
      %p194 = scmp.lt.s32.totalorder %s18, 3
      %p195 = pnand %p193, %p194
      %p196 = pneg %p195
      // Predicated region
      $region29: #{tpu_custom_call.1} parent=5 // pred_check
        _
      $region30: #{tpu_custom_call.1} parent=5 // pred_check_branch
        %198 = sbr.rel (%p195) target = $region32
      $region31: #{tpu_custom_call.1} parent=5 // pred_region
        %s199 = ssub.s32 %s18, 1
        %s200 = sand.u32 %s45, 1
        %s201 = scalar_lea.sflag [#allocation3], %s200
        %s202 = sand.u32 %s45, 1
        %s203 = smul.addr %s202, 8
        %s204 = scalar_lea.vmem [#allocation2], %s203
        // Predicated region
        $region33: #{tpu_custom_call.1} parent=31 // pred_check
          %p205 = pneg %p58
        $region34: #{tpu_custom_call.1} parent=31 // pred_check_branch
          %207 = sbr.rel (%p205) target = $region36
        $region35: #{tpu_custom_call.1} parent=31 // pred_region
          %208 = dma.done %s201, 128
        $region36: #{tpu_custom_call.1} parent=31 // pred_fallthru
          _
        %s209 = sand.u32 %s73, 1
        %s210 = scalar_lea.sflag [#allocation6], %s209
        %s211 = sand.u32 %s73, 1
        %s212 = smul.addr %s211, 8
        %s213 = scalar_lea.vmem [#allocation5], %s212
        // Predicated region
        $region37: #{tpu_custom_call.1} parent=31 // pred_check
          %p214 = pneg %p86
        $region38: #{tpu_custom_call.1} parent=31 // pred_check_branch
          %216 = sbr.rel (%p214) target = $region40
        $region39: #{tpu_custom_call.1} parent=31 // pred_region
          %217 = dma.done %s210, 128
        $region40: #{tpu_custom_call.1} parent=31 // pred_fallthru
          _
        %s218 = sand.u32 %s45, 1
        %s219 = scalar_lea.sflag [#allocation3], %s218
        %s220 = sand.u32 %s45, 1
        %s221 = smul.addr %s220, 8
        %s222 = scalar_lea.vmem [#allocation2], %s221
        %p223 = pneg %p58
        %p224 = pneg %p55
        %s225 = sand.u32 %s73, 1
        %s226 = scalar_lea.sflag [#allocation6], %s225
        %s227 = sand.u32 %s73, 1
        %s228 = smul.addr %s227, 8
        %s229 = scalar_lea.vmem [#allocation5], %s228
        %p230 = pneg %p86
        %p231 = pneg %p83
        %p232 = pneg %p107
        %p233 = pneg %p104
        %p234 = pneg %p133
        %p235 = pneg %p130
        %s236 = sand.u32 %s120, 1
        %s237 = scalar_lea.sflag [#allocation4], %s236
        %s238 = sand.u32 %s120, 1
        %s239 = smul.addr %s238, 8
        %s240 = scalar_lea.vmem [#allocation7], %s239
        %s241 = sadd.s32 %s27, %s28
        %s242 = sadd.s32 %s27, %s28
        %p243 = scmp.eq.s32.totalorder %s28, 0
        // Predicated region
        $region41: #{tpu_custom_call.1} parent=31 // pred_check
          %p244 = pneg %p243
        $region42: #{tpu_custom_call.1} parent=31 // pred_check_branch
          %246 = sbr.rel (%p244) target = $region44
        $region43: #{tpu_custom_call.1} parent=31 // pred_region
          %247 = vst [vmem:[%s240] sm:$0xff] 0.0
        $region44: #{tpu_custom_call.1} parent=31 // pred_fallthru
          _
        %v248 = vld [vmem:[%s204] sm:$0xff]
        %v249 = vld [vmem:[%s213] sm:$0xff]
        %v250 = vld [vmem:[%s2] sm:$0x1]
        %vm251 = vcmp.gt.f32.partialorder %v249, 0.5
        %v252 = vsub.f32 1.0, %v248
        %v253 = vsel %vm251, %v248, %v252
        %v254 = vlog2.pop %v253
        %v255 = vmul.f32 %v254, 0.6931472
        %v256 = vmax.f32 %v255, -100.0
        %v257 = vsub.f32 0.0, %v256
        %v258 = vsub.f32 1.0, %v253
        %v259 = vmul.f32 %v258, %v258
        %vm260 = vcmp.gt.f32.partialorder %v248, 0.5
        %v261 = vsub.f32 1.0, %v249
        %v262 = vmul.f32 %v261, 3.0
        %v263 = vmul.f32 %v249, 0.0
        %v264 = vsel %vm260, %v262, %v263
        %v265 = vadd.f32 %v264, 1.0
        %v267 = vlaneseq
        %v268 = vshrl.u32 %v267, 7
        %v269 = vsub.s32 0, %v268
        %v270 = vrot.slane %v250, %v269
        %v272 = vmul.f32 %v257, %v270
        %v273 = vmul.f32 %v272, %v259
        %v274 = vmul.f32 %v273, %v265
        %v275 = vld [vmem:[%s240] sm:$0xff]
        %v276 = vadd.f32 %v274, 0.0
        %v277 = vadd.f32 %v275, %v276
        %278 = vst [vmem:[%s240] sm:$0xff] %v277
        %s279 = sand.u32 %s120, 1
        %s280 = scalar_lea.sflag [#allocation4], %s279
        %s281 = sand.u32 %s120, 1
        %s282 = smul.addr %s281, 8
        %s283 = scalar_lea.vmem [#allocation7], %s282
        // Predicated region
        $region45: #{tpu_custom_call.1} parent=31 // pred_check
          %p284 = pneg %p130
        $region46: #{tpu_custom_call.1} parent=31 // pred_check_branch
          %286 = sbr.rel (%p284) target = $region48
        $region47: #{tpu_custom_call.1} parent=31 // pred_region
          %s288 = ssub.s32 128, 128
          %289 = vsyncadd %s280, %s288
          %s290 = smul.addr %s27, 128
          %s291 = scalar_lea.hbm %s3, %s290
          %s293 = sshll.u32 %s283, 4
          %s294 = int_to_ptr.vmem [resolvable:$true] %s293
          %296 = dma.vmem_to_hbm [thread:$0]  %s294, 128, %s291, %s280
        $region48: #{tpu_custom_call.1} parent=31 // pred_fallthru
          _
      $region32: #{tpu_custom_call.1} parent=5 // pred_fallthru
        _
      %p297 = scmp.le.s32.totalorder 2, %s18
      // Predicated region
      $region49: #{tpu_custom_call.1} parent=5 // pred_check
        %p298 = pneg %p297
      $region50: #{tpu_custom_call.1} parent=5 // pred_check_branch
        %300 = sbr.rel (%p298) target = $region52
      $region51: #{tpu_custom_call.1} parent=5 // pred_region
        %s301 = ssub.s32 %s18, 2
        // Predicated region
        $region53: #{tpu_custom_call.1} parent=51 // pred_check
          %p302 = pneg %p136
        $region54: #{tpu_custom_call.1} parent=51 // pred_check_branch
          %304 = sbr.rel (%p302) target = $region56
        $region55: #{tpu_custom_call.1} parent=51 // pred_region
          %s305 = sand.u32 %s121, 1
          %s306 = scalar_lea.sflag [#allocation4], %s305
          %s307 = sand.u32 %s121, 1
          %s308 = smul.addr %s307, 8
          %s309 = scalar_lea.vmem [#allocation7], %s308
          %310 = dma.done %s306, 128
        $region56: #{tpu_custom_call.1} parent=51 // pred_fallthru
          _
      $region52: #{tpu_custom_call.1} parent=5 // pred_fallthru
        _
    $region6: #{tpu_custom_call.1} parent=1 // loop_footer
      %s22 = sadd.s32 1, %s18
    $region7: #{tpu_custom_call.1} parent=1 // loop_footer_branch
      %17 = sbr.rel target = $region3
    $region8: #{tpu_custom_call.1} parent=1 // loop_exit
      _
    %311 = vsyncpa [#allocation3], 1
    %s312 = scalar_lea.sflag [#allocation3], 1
    %313 = vsyncpa %s312, 1
    %314 = vsyncpa [#allocation6], 1
    %s315 = scalar_lea.sflag [#allocation6], 1
    %316 = vsyncpa %s315, 1
    %317 = vsyncpa [#allocation4], 1
    %s318 = scalar_lea.sflag [#allocation4], 1
    %319 = vsyncpa %s318, 1

</llo_original>
